<compile_context>
chip_gen: v5e
topology: v5e:2x2
jax: 0.10.0
libtpu: 0.0.40
codegen_flags: <defaults>
</compile_context>

<pallas_src>
import jax
import jax.numpy as jnp
from jax import lax
from jax.experimental import pallas as pl
from jax.experimental.pallas import tpu as pltpu

COLUMNS = ['WAVE', 'LDS_ALLOC', 'VGPR_AGPR_ALLOC', 'VALU', 'VMEM', 'LDS', 'MFMA',
           'SALU', 'SMEM', 'BRANCH', 'CYCLES', 'KERNEL', 'DISPATCH']
IN_DIM = len(COLUMNS) - 3   # 10
H1 = 16
H2 = 8
OUT_DIM = 1


def _round_up(n, m):
    return ((n + m - 1) // m) * m


def mlp_kernel(x_ref, w1_ref, b1_ref, w2_ref, b2_ref, w3_ref, b3_ref, o_ref):
    # Feature-major: batch is the lane axis of every intermediate.
    x = x_ref[...]                                                     # (TB, 10)
    # (16, 10) . (TB, 10)^T -> (16, TB): contract the feature axis of both
    # (same NT dimension numbers as q @ k.T in flash attention).
    h1 = lax.dot_general(w1_ref[...], x, (((1,), (1,)), ((), ())),
                         preferred_element_type=jnp.float32)           # (16, TB)
    h1 = jnp.maximum(h1 + b1_ref[...], 0.0)                            # lane-dense ReLU
    h2 = jnp.dot(w2_ref[...], h1, preferred_element_type=jnp.float32)  # (8, TB)
    h2 = jnp.maximum(h2 + b2_ref[...], 0.0)
    y = jnp.dot(w3_ref[...], h2, preferred_element_type=jnp.float32)   # (1, TB)
    o_ref[...] = (y + b3_ref[...]).astype(o_ref.dtype)                 # single lane-dense store


def mlp_forward(x, params, *, tb_max=8192):
    """x: (B, 10) float32. Returns (B, 1) float32."""
    B = x.shape[0]
    w1, b1 = params["w1"], params["b1"]
    w2, b2 = params["w2"], params["b2"]
    w3, b3 = params["w3"], params["b3"]

    # Batch tile: multiple of 256 for large batches (full-width MXU chunks),
    # capped at tb_max for VMEM.  Guarantee >= 2 grid steps when possible so
    # the "parallel" axis shards across both v7x TensorCores.  Tiny batches
    # use one whole-batch tile at sublane (8-row) granularity.
    if B >= 512:
        tb = min(tb_max, _round_up(B, 256))
        if B <= tb:
            tb = _round_up(pl.cdiv(B, 2), 256)
    else:
        tb = _round_up(B, 8)
    num_tiles = pl.cdiv(B, tb)

    def const_spec(shape):
        return pl.BlockSpec(shape, lambda i: (0, 0))

    b_eff = num_tiles * tb
    flops = 2 * (IN_DIM * H1 + H1 * H2 + H2 * OUT_DIM) * b_eff
    bytes_accessed = (b_eff * (IN_DIM + OUT_DIM) * 4 +
                      4 * (IN_DIM * H1 + H1 + H1 * H2 + H2 + H2 * OUT_DIM + OUT_DIM))

    out = pl.pallas_call(
        mlp_kernel,
        out_shape=jax.ShapeDtypeStruct((num_tiles, tb), jnp.float32),
        grid=(num_tiles,),
        in_specs=[
            pl.BlockSpec((tb, IN_DIM), lambda i: (i, 0)),   # x streamed per batch tile
            const_spec(w1.shape), const_spec(b1.shape),     # VMEM-resident weights/biases
            const_spec(w2.shape), const_spec(b2.shape),
            const_spec(w3.shape), const_spec(b3.shape),
        ],
        out_specs=pl.BlockSpec((1, tb), lambda i: (i, 0)),  # lane-dense output slab
        compiler_params=pltpu.CompilerParams(
            dimension_semantics=("parallel",),
            # ~10 MiB actually used at tb=8192 (x double-buffered lane-padded
            # to 128 + (16,TB)/(8,TB) intermediates); 32 MiB is safe on
            # v5e (128 MiB), v6e (128 MiB) and v7x (64 MiB) physical VMEM.
            vmem_limit_bytes=32 * 1024 * 1024),
        cost_estimate=pl.CostEstimate(flops=flops, transcendentals=0,
                                      bytes_accessed=bytes_accessed),
    )(x, w1, b1, w2, b2, w3, b3)

    # (num_tiles, tb) row-major == batch order; drop ragged tail, restore (B, 1).
    return out.reshape(-1)[:B].reshape(B, OUT_DIM)


def init_params(key):
    """Deterministic init mimicking nn.Linear's U(-1/sqrt(fan_in), 1/sqrt(fan_in)).
    Weights kept in the PyTorch-native (out, in) layout (what the feature-major
    kernel consumes directly); biases as (out, 1) columns for lane-broadcast."""
    keys = jax.random.split(key, 6)

    def linear(kw, kb, fan_in, fan_out):
        bound = 1.0 / jnp.sqrt(float(fan_in))
        w = jax.random.uniform(kw, (fan_out, fan_in), jnp.float32, -bound, bound)
        b = jax.random.uniform(kb, (fan_out, 1), jnp.float32, -bound, bound)
        return w, b

    w1, b1 = linear(keys[0], keys[1], IN_DIM, H1)
    w2, b2 = linear(keys[2], keys[3], H1, H2)
    w3, b3 = linear(keys[4], keys[5], H2, OUT_DIM)
    return {"w1": w1, "b1": b1, "w2": w2, "b2": b2, "w3": w3, "b3": b3}


def mlp_reference(x, params):
    h1 = jnp.maximum(x @ params["w1"].T + params["b1"].T, 0.0)
    h2 = jnp.maximum(h1 @ params["w2"].T + params["b2"].T, 0.0)
    return h2 @ params["w3"].T + params["b3"].T


if __name__ == "__main__":
    key = jax.random.PRNGKey(0)
    k_params, k_x = jax.random.split(key)

    params = init_params(k_params)
    batch = 8
    x = jax.random.normal(k_x, (batch, IN_DIM), jnp.float32)

    out = mlp_forward(x, params)
    out = jax.block_until_ready(out)

    ref = mlp_reference(x, params)
    assert out.shape == (batch, OUT_DIM), out.shape
    assert jnp.allclose(out, ref, atol=1e-5, rtol=1e-5), "mismatch vs reference"

    print("KERNEL_OK")
</pallas_src>

<mosaic_0001>
module attributes {stable_mosaic.version = 11 : i64} {
  func.func @mlp_kernel(%arg0: i32, %arg1: memref<8x10xf32, #tpu.memory_space<vmem>>, %arg2: memref<16x10xf32, #tpu.memory_space<vmem>>, %arg3: memref<16x1xf32, #tpu.memory_space<vmem>>, %arg4: memref<8x16xf32, #tpu.memory_space<vmem>>, %arg5: memref<8x1xf32, #tpu.memory_space<vmem>>, %arg6: memref<1x8xf32, #tpu.memory_space<vmem>>, %arg7: memref<1x1xf32, #tpu.memory_space<vmem>>, %arg8: memref<1x8xf32, #tpu.memory_space<vmem>>) attributes {dimension_semantics = [#tpu.dimension_semantics<parallel>], iteration_bounds = array<i64: 1>, scalar_prefetch = 0 : i64, scratch_operands = 0 : i64, tpu.core_type = #tpu.core_type<tc>, window_params = [{transform_indices = @transform_0, window_bounds = array<i64: 8, 10>}, {pipeline_mode = #tpu.pipeline_mode<synchronous>, transform_indices = @transform_1, window_bounds = array<i64: 16, 10>}, {pipeline_mode = #tpu.pipeline_mode<synchronous>, transform_indices = @transform_2, window_bounds = array<i64: 16, 1>}, {pipeline_mode = #tpu.pipeline_mode<synchronous>, transform_indices = @transform_3, window_bounds = array<i64: 8, 16>}, {pipeline_mode = #tpu.pipeline_mode<synchronous>, transform_indices = @transform_4, window_bounds = array<i64: 8, 1>}, {pipeline_mode = #tpu.pipeline_mode<synchronous>, transform_indices = @transform_5, window_bounds = array<i64: 1, 8>}, {pipeline_mode = #tpu.pipeline_mode<synchronous>, transform_indices = @transform_6, window_bounds = array<i64: 1, 1>}, {transform_indices = @transform_7, window_bounds = array<i64: 1, 8>}]} {
    %c0 = arith.constant 0 : index
    %c0_0 = arith.constant 0 : index
    %0 = vector.load %arg1[%c0, %c0_0] : memref<8x10xf32, #tpu.memory_space<vmem>>, vector<8x10xf32>
    %c0_1 = arith.constant 0 : index
    %c0_2 = arith.constant 0 : index
    %1 = vector.load %arg2[%c0_1, %c0_2] : memref<16x10xf32, #tpu.memory_space<vmem>>, vector<16x10xf32>
    %cst = arith.constant dense<0.000000e+00> : vector<16x8xf32>
    %2 = tpu.matmul %1, %0, %cst {dimension_numbers = #tpu.dot_dimension_numbers<[1], [1], [0], [0], [0, 0, 1, 0], [], []>} : vector<16x10xf32>, vector<8x10xf32>, vector<16x8xf32> -> vector<16x8xf32>
    %c0_3 = arith.constant 0 : index
    %c0_4 = arith.constant 0 : index
    %3 = vector.load %arg3[%c0_3, %c0_4] : memref<16x1xf32, #tpu.memory_space<vmem>>, vector<16x1xf32>
    %4 = vector.broadcast %3 : vector<16x1xf32> to vector<16x8xf32>
    %5 = arith.addf %2, %4 : vector<16x8xf32>
    %cst_5 = arith.constant 0.000000e+00 : f32
    %6 = vector.broadcast %cst_5 : f32 to vector<16x8xf32>
    %7 = arith.maximumf %5, %6 : vector<16x8xf32>
    %c0_6 = arith.constant 0 : index
    %c0_7 = arith.constant 0 : index
    %8 = vector.load %arg4[%c0_6, %c0_7] : memref<8x16xf32, #tpu.memory_space<vmem>>, vector<8x16xf32>
    %cst_8 = arith.constant dense<0.000000e+00> : vector<8x8xf32>
    %9 = tpu.matmul %8, %7, %cst_8 {dimension_numbers = #tpu.dot_dimension_numbers<[1], [0], [0], [1], [0, 0, 1, 1], [], []>} : vector<8x16xf32>, vector<16x8xf32>, vector<8x8xf32> -> vector<8x8xf32>
    %c0_9 = arith.constant 0 : index
    %c0_10 = arith.constant 0 : index
    %10 = vector.load %arg5[%c0_9, %c0_10] : memref<8x1xf32, #tpu.memory_space<vmem>>, vector<8x1xf32>
    %11 = vector.broadcast %10 : vector<8x1xf32> to vector<8x8xf32>
    %12 = arith.addf %9, %11 : vector<8x8xf32>
    %cst_11 = arith.constant 0.000000e+00 : f32
    %13 = vector.broadcast %cst_11 : f32 to vector<8x8xf32>
    %14 = arith.maximumf %12, %13 : vector<8x8xf32>
    %c0_12 = arith.constant 0 : index
    %c0_13 = arith.constant 0 : index
    %15 = vector.load %arg6[%c0_12, %c0_13] : memref<1x8xf32, #tpu.memory_space<vmem>>, vector<1x8xf32>
    %cst_14 = arith.constant dense<0.000000e+00> : vector<1x8xf32>
    %16 = tpu.matmul %15, %14, %cst_14 {dimension_numbers = #tpu.dot_dimension_numbers<[1], [0], [0], [1], [0, 0, 1, 1], [], []>} : vector<1x8xf32>, vector<8x8xf32>, vector<1x8xf32> -> vector<1x8xf32>
    %c0_15 = arith.constant 0 : index
    %c0_16 = arith.constant 0 : index
    %17 = vector.load %arg7[%c0_15, %c0_16] : memref<1x1xf32, #tpu.memory_space<vmem>>, vector<1x1xf32>
    %18 = vector.broadcast %17 : vector<1x1xf32> to vector<1x8xf32>
    %19 = arith.addf %16, %18 : vector<1x8xf32>
    %c0_17 = arith.constant 0 : index
    %c0_18 = arith.constant 0 : index
    %20 = vector.load %arg8[%c0_17, %c0_18] : memref<1x8xf32, #tpu.memory_space<vmem>>, vector<1x8xf32>
    tpu.vector_store %arg8[%c0_17, %c0_18], %19 {strides = array<i32>} : memref<1x8xf32, #tpu.memory_space<vmem>>, vector<1x8xf32>,
    return
  }
  func.func @transform_0(%arg0: i32) -> (i32, i32) {
    %c0_i32 = arith.constant 0 : i32
    %c0_i32_0 = arith.constant 0 : i32
    return %arg0, %c0_i32 : i32, i32
  }
  func.func @transform_1(%arg0: i32) -> (i32, i32) {
    %c0_i32 = arith.constant 0 : i32
    %c0_i32_0 = arith.constant 0 : i32
    %c0_i32_1 = arith.constant 0 : i32
    return %c0_i32, %c0_i32_0 : i32, i32
  }
  func.func @transform_2(%arg0: i32) -> (i32, i32) {
    %c0_i32 = arith.constant 0 : i32
    %c0_i32_0 = arith.constant 0 : i32
    %c0_i32_1 = arith.constant 0 : i32
    return %c0_i32, %c0_i32_0 : i32, i32
  }
  func.func @transform_3(%arg0: i32) -> (i32, i32) {
    %c0_i32 = arith.constant 0 : i32
    %c0_i32_0 = arith.constant 0 : i32
    %c0_i32_1 = arith.constant 0 : i32
    return %c0_i32, %c0_i32_0 : i32, i32
  }
  func.func @transform_4(%arg0: i32) -> (i32, i32) {
    %c0_i32 = arith.constant 0 : i32
    %c0_i32_0 = arith.constant 0 : i32
    %c0_i32_1 = arith.constant 0 : i32
    return %c0_i32, %c0_i32_0 : i32, i32
  }
  func.func @transform_5(%arg0: i32) -> (i32, i32) {
    %c0_i32 = arith.constant 0 : i32
    %c0_i32_0 = arith.constant 0 : i32
    %c0_i32_1 = arith.constant 0 : i32
    return %c0_i32, %c0_i32_0 : i32, i32
  }
  func.func @transform_6(%arg0: i32) -> (i32, i32) {
    %c0_i32 = arith.constant 0 : i32
    %c0_i32_0 = arith.constant 0 : i32
    %c0_i32_1 = arith.constant 0 : i32
    return %c0_i32, %c0_i32_0 : i32, i32
  }
  func.func @transform_7(%arg0: i32) -> (i32, i32) {
    %c0_i32 = arith.constant 0 : i32
    %c0_i32_0 = arith.constant 0 : i32
    return %arg0, %c0_i32 : i32, i32
  }
}

</mosaic_0001>

<llo_original>
// kernel: tpu_custom_call.1
$region0: #{tpu_custom_call.1}
  #allocation0 [shape = 'u32[]', space=smem, size = 0x4, offset = 0x4, fixed_abs, tag = 'smem constant byte address 0x4 - core index']
  #allocation1 [shape = 'u32[72,128]{1,0:T(1,128)}', space=vmem, size = 0x9000, scoped, tag = 'internal scratch']
  #allocation2 [shape = 'f32[1,1]{1,0:T(1,128)S(1)}', space=vmem, size = 0x200, scoped, tag = 'scoped memory for tpu_custom_call.1']
  %s0 = inlined_call_operand.vmem [shape: f32[8,10], index: 0, kind: input, shape index: {}]
  %s1 = inlined_call_operand.vmem [shape: f32[16,10], index: 1, kind: input, shape index: {}]
  %s2 = inlined_call_operand.vmem [shape: f32[16,1], index: 2, kind: input, shape index: {}]
  %s3 = inlined_call_operand.hbm [shape: f32[8,16], index: 3, kind: input, shape index: {}]
  %s4 = inlined_call_operand.vmem [shape: f32[8,1], index: 4, kind: input, shape index: {}]
  %s5 = inlined_call_operand.vmem [shape: f32[1,8], index: 5, kind: input, shape index: {}]
  %s6 = inlined_call_operand.<no memory space> [shape: f32[1,1], index: 6, kind: input, shape index: {}]
  %s7 = inlined_call_operand.hbm [shape: f32[1,8], index: 7, kind: output, shape index: {}]
  %s8 = sld [smem:[#allocation0]]
  $region42: #{tpu_custom_call.1} parent=0
    _
  %s10 = ssub.s32 1, %s8
  %s11 = scalar_select 0, %s10, %s8
  %v12 = vstv %s6
  %13 = vst [vmem:[#allocation2] sm:$0x1] %v12
  $region1: #{tpu_custom_call.1} parent=0
    #allocation3 [shape = 'u8[4096]{0}', space=vmem, size = 0x1000, scoped, tag = 'input window, operand 3, single buffered']
    #allocation4 [shape = 's32[1]{0}', space=sflag, size = 0x4, scoped, tag = 'scoped memory for tpu_custom_call.1']
    #allocation5 [shape = 's32[1]{0}', space=sflag, size = 0x4, scoped, tag = 'scoped memory for tpu_custom_call.1']
    #allocation6 [shape = 'u8[512]{0}', space=vmem, size = 0x400, scoped, tag = 'output window, operand 0, single buffered']
    %14 = vsyncpa [#allocation4], 0
    %15 = vsyncpa [#allocation5], 0
    // Predicated region
    $region2: #{tpu_custom_call.1} parent=1 // pred_check
      _
    $region3: #{tpu_custom_call.1} parent=1 // pred_check_branch
      %17 = sbr.rel (0) target = $region5
    $region4: #{tpu_custom_call.1} parent=1 // pred_region
      _
    $region5: #{tpu_custom_call.1} parent=1 // pred_fallthru
      _
    // Predicated region
    $region6: #{tpu_custom_call.1} parent=1 // pred_check
      _
    $region7: #{tpu_custom_call.1} parent=1 // pred_check_branch
      %19 = sbr.rel (0) target = $region9
    $region8: #{tpu_custom_call.1} parent=1 // pred_region
      _
    $region9: #{tpu_custom_call.1} parent=1 // pred_fallthru
      _
    // Predicated region
    $region10: #{tpu_custom_call.1} parent=1 // pred_check
      _
    $region11: #{tpu_custom_call.1} parent=1 // pred_check_branch
      %21 = sbr.rel (0) target = $region13
    $region12: #{tpu_custom_call.1} parent=1 // pred_region
      _
    $region13: #{tpu_custom_call.1} parent=1 // pred_fallthru
      _
    // Predicated region
    $region14: #{tpu_custom_call.1} parent=1 // pred_check
      _
    $region15: #{tpu_custom_call.1} parent=1 // pred_check_branch
      %23 = sbr.rel (0) target = $region17
    $region16: #{tpu_custom_call.1} parent=1 // pred_region
      %25 = vsyncadd [#allocation4], 0
      %s27 = sshll.u32 %s3, 4
      %s28 = int_to_ptr.hbm [resolvable:$true] %s27
      %s29 = sshll.u32 [#allocation3], 4
      %s30 = int_to_ptr.vmem [resolvable:$true] %s29
      %32 = dma.hbm_to_vmem [thread:$0]  %s28, 128, %s30, [#allocation4]
    $region17: #{tpu_custom_call.1} parent=1 // pred_fallthru
      _
    // Predicated region
    $region18: #{tpu_custom_call.1} parent=1 // pred_check
      _
    $region19: #{tpu_custom_call.1} parent=1 // pred_check_branch
      %34 = sbr.rel (0) target = $region21
    $region20: #{tpu_custom_call.1} parent=1 // pred_region
      _
    $region21: #{tpu_custom_call.1} parent=1 // pred_fallthru
      _
    // Predicated region
    $region22: #{tpu_custom_call.1} parent=1 // pred_check
      _
    $region23: #{tpu_custom_call.1} parent=1 // pred_check_branch
      %36 = sbr.rel (0) target = $region25
    $region24: #{tpu_custom_call.1} parent=1 // pred_region
      _
    $region25: #{tpu_custom_call.1} parent=1 // pred_fallthru
      _
    // Predicated region
    $region26: #{tpu_custom_call.1} parent=1 // pred_check
      _
    $region27: #{tpu_custom_call.1} parent=1 // pred_check_branch
      %38 = sbr.rel (0) target = $region29
    $region28: #{tpu_custom_call.1} parent=1 // pred_region
      _
    $region29: #{tpu_custom_call.1} parent=1 // pred_fallthru
      _
    // Predicated region
    $region30: #{tpu_custom_call.1} parent=1 // pred_check
      _
    $region31: #{tpu_custom_call.1} parent=1 // pred_check_branch
      %40 = sbr.rel (0) target = $region33
    $region32: #{tpu_custom_call.1} parent=1 // pred_region
      %42 = dma.done [#allocation4], 128
    $region33: #{tpu_custom_call.1} parent=1 // pred_fallthru
      _
    %v43 = vld [vmem:[%s0] sm:$0xff]
    %v44 = vld [vmem:[%s1] sm:$0xff]
    %v45 = vld [vmem:[%s1 + $0x8] sm:$0xff]
    %v46 = vld [vmem:[%s2] sm:$0xff]
    %v47 = vld [vmem:[%s2 + $0x8] sm:$0xff]
    %49 = vset.pattern.permute.xlu0 0
    %50 = vperm.xlu0 %49, %v46
    %v51 = vpop.permute.xlu0 %50
    %54 = vset.pattern.permute.xlu0 0
    %55 = vperm.xlu0 %54, %v47
    %v56 = vpop.permute.xlu0 %55
    %vm58 = vcmask 80896
    %v60 = vsel %vm58, %v44, 0
    %v63 = vsel %vm58, %v45, 0
    %v66 = vsel %vm58, %v43, 0
    %68 = vmatpush.xpose.msra.mxu0 0.0
    %69 = vmatpush.xpose.msra.mxu0 0.0
    %70 = vmatpush.xpose.msra.mxu0 0.0
    %71 = vmatpush.xpose.msra.mxu0 0.0
    %72 = vmatpush.xpose.msra.mxu0 0.0
    %73 = vmatpush.xpose.msra.mxu0 0.0
    %74 = vmatpush.xpose.msra.mxu0 0.0
    %75 = vmatpush.xpose.msra.mxu0 0.0
    %76 = vmatpush.xpose.msra.mxu0 0.0
    %77 = vmatpush.xpose.msra.mxu0 0.0
    %78 = vmatpush.xpose.msra.mxu0 0.0
    %79 = vmatpush.xpose.msra.mxu0 0.0
    %80 = vmatpush.xpose.msra.mxu0 0.0
    %81 = vmatpush.xpose.msra.mxu0 0.0
    %82 = vmatpush.xpose.msra.mxu0 0.0
    %83 = vmatpush.xpose.msra.mxu0 %v66
    %84 = vmatmul.f32.gmra.mxu0 %v60
    %v85 = vpop.f32.mrf.mxu0
    %v86 = vadd.f32 %v51, %v85
    %87 = vmatmul.f32.gmra.mxu0 %v63
    %v88 = vpop.f32.mrf.mxu0
    %v89 = vadd.f32 %v56, %v88
    %90 = vdwg.mxu0
    %v91 = vmax.f32 %v86, 0.0
    %v92 = vmax.f32 %v89, 0.0
    %v93 = vld [vmem:[#allocation3] sm:$0xff]
    %v94 = vld [vmem:[%s4] sm:$0xff]
    %96 = vset.pattern.permute.xlu0 0
    %97 = vperm.xlu0 %96, %v94
    %v98 = vpop.permute.xlu0 %97
    %vm100 = vcmask 130048
    %v102 = vsel %vm100, %v93, 0
    %104 = vmatpush.msra.mxu0 0.0
    %105 = vmatpush.msra.mxu0 0.0
    %106 = vmatpush.msra.mxu0 0.0
    %107 = vmatpush.msra.mxu0 0.0
    %108 = vmatpush.msra.mxu0 0.0
    %109 = vmatpush.msra.mxu0 0.0
    %110 = vmatpush.msra.mxu0 0.0
    %111 = vmatpush.msra.mxu0 0.0
    %112 = vmatpush.msra.mxu0 0.0
    %113 = vmatpush.msra.mxu0 0.0
    %114 = vmatpush.msra.mxu0 0.0
    %115 = vmatpush.msra.mxu0 0.0
    %116 = vmatpush.msra.mxu0 0.0
    %117 = vmatpush.msra.mxu0 0.0
    %118 = vmatpush.msra.mxu0 %v92
    %119 = vmatpush.msra.mxu0 %v91
    %120 = vmatmul.f32.gmra.mxu0 %v102
    %v121 = vpop.f32.mrf.mxu0
    %v122 = vadd.f32 %v98, %v121
    %123 = vdwg.mxu0
    %v124 = vmax.f32 %v122, 0.0
    %v125 = vld [vmem:[%s5] sm:$0x1]
    %v126 = vld [vmem:[#allocation2] sm:$0x1]
    %128 = vset.pattern.permute.xlu0 0
    %129 = vperm.xlu0 %128, %v126
    %v130 = vpop.permute.xlu0 %129
    %v132 = vperm.slane %v130, 0
    %vm133 = vcmask 64512
    %v135 = vsel %vm133, %v125, 0
    %137 = vmatpush.msra.mxu0 0.0
    %138 = vmatpush.msra.mxu0 0.0
    %139 = vmatpush.msra.mxu0 0.0
    %140 = vmatpush.msra.mxu0 0.0
    %141 = vmatpush.msra.mxu0 0.0
    %142 = vmatpush.msra.mxu0 0.0
    %143 = vmatpush.msra.mxu0 0.0
    %144 = vmatpush.msra.mxu0 0.0
    %145 = vmatpush.msra.mxu0 0.0
    %146 = vmatpush.msra.mxu0 0.0
    %147 = vmatpush.msra.mxu0 0.0
    %148 = vmatpush.msra.mxu0 0.0
    %149 = vmatpush.msra.mxu0 0.0
    %150 = vmatpush.msra.mxu0 0.0
    %151 = vmatpush.msra.mxu0 0.0
    %152 = vmatpush.msra.mxu0 %v124
    %153 = vmatmul.f32.gmra.mxu0 %v135
    %v154 = vpop.f32.mrf.mxu0
    %v155 = vadd.f32 %v132, %v154
    %156 = vdwg.mxu0
    %vm157 = vcmask 57344
    %158 = vst.msk [vmem:[#allocation6] sm:$0x1] %vm157, %v155
    // Predicated region
    $region34: #{tpu_custom_call.1} parent=1 // pred_check
      _
    $region35: #{tpu_custom_call.1} parent=1 // pred_check_branch
      %160 = sbr.rel (0) target = $region37
    $region36: #{tpu_custom_call.1} parent=1 // pred_region
      %162 = vsyncadd [#allocation5], 0
      %s164 = sshll.u32 [#allocation6], 4
      %s165 = int_to_ptr.vmem [resolvable:$true] %s164
      %s166 = sshll.u32 %s7, 4
      %s167 = int_to_ptr.hbm [resolvable:$true] %s166
      %169 = dma.vmem_to_hbm [thread:$0]  %s165, 16, %s167, [#allocation5]
    $region37: #{tpu_custom_call.1} parent=1 // pred_fallthru
      _
    // Predicated region
    $region38: #{tpu_custom_call.1} parent=1 // pred_check
      _
    $region39: #{tpu_custom_call.1} parent=1 // pred_check_branch
      %171 = sbr.rel (0) target = $region41
    $region40: #{tpu_custom_call.1} parent=1 // pred_region
      %173 = dma.done [#allocation5], 16
    $region41: #{tpu_custom_call.1} parent=1 // pred_fallthru
      _
    %174 = vsyncpa [#allocation4], 1
    %175 = vsyncpa [#allocation5], 1

</llo_original>
